<compile_context>
chip_gen: v7x
topology: tpu7x:2x2x1
jax: 0.10.0
libtpu: 0.0.40
codegen_flags: <defaults>
</compile_context>

<pallas_src>
import functools

import jax
import jax.numpy as jnp
from jax.experimental import pallas as pl
from jax.experimental.pallas import tpu as pltpu

LANES = 128
SUBLANES = 8


def _sublane_multiple(dtype) -> int:
    """Sublane alignment for a dtype (8 for 32-bit, 16 for 16-bit, 32 for 8-bit)."""
    bits = jnp.dtype(dtype).itemsize * 8
    return max(SUBLANES, 256 // bits)


def _pst_loss_kernel(o_ref, t_ref, loss_ref, acc_ref, *,
                     rows, tile_rows, neg_inv_n, needs_row_mask):
    i = pl.program_id(0)

    @pl.when(i == 0)
    def _():
        acc_ref[...] = jnp.zeros_like(acc_ref)

    o = o_ref[...].astype(jnp.float32)
    valid = t_ref[...] > 0

    if needs_row_mask:
        # Only the last (partial) tile has garbage rows past `rows`; the compare
        # is trivially true on interior tiles and costs ~3 VALU ops per vreg.
        row_idx = jax.lax.broadcasted_iota(jnp.int32, (tile_rows, LANES), 0)
        valid = valid & (row_idx < (rows - i * tile_rows))

    # log(1.0) == 0 for masked-out lanes -> they contribute exactly 0 to the
    # sum (matching boolean indexing).  The sign is folded into neg_inv_n.
    contrib = jnp.log(jnp.where(valid, o, jnp.float32(1.0)))

    # Fold the (tile_rows, 128) contribution into the single-vreg (8, 128)
    # accumulator with pure VPU adds; the reshape does not cross (8,128) tiles.
    acc_ref[...] += contrib.reshape(tile_rows // SUBLANES, SUBLANES, LANES).sum(axis=0)

    @pl.when(i == pl.num_programs(0) - 1)
    def _():
        loss_ref[0, 0] = jnp.sum(acc_ref[...]) * jnp.float32(neg_inv_n)


def pst_loss(out, target, *, rows_per_tile=4096):
    """loss = -log(out[target > 0]).sum() / out.shape[0]"""
    n = out.shape[0]
    total = out.size

    flat_o = out.reshape(-1)
    flat_t = target.reshape(-1)
    if flat_t.dtype == jnp.bool_:
        flat_t = flat_t.astype(jnp.int8)

    # Lane-aligned prefix is handled by the kernel; the <=127-element tail (if
    # any) is handled by a tiny jnp expression below (no full-array jnp.pad).
    prefix = (total // LANES) * LANES
    rows = prefix // LANES

    align = max(_sublane_multiple(flat_o.dtype), _sublane_multiple(flat_t.dtype))

    if rows < align:
        # Degenerate tiny input: not even one aligned tile -> plain jnp.
        o_f = flat_o.astype(jnp.float32)
        return jnp.sum(jnp.where(flat_t > 0, -jnp.log(o_f), 0.0)) / n

    if prefix == total:
        o2 = flat_o.reshape(rows, LANES)      # free: pure metadata reshape
        t2 = flat_t.reshape(rows, LANES)
    else:
        o2 = flat_o[:prefix].reshape(rows, LANES)
        t2 = flat_t[:prefix].reshape(rows, LANES)

    # Tile rows: multiple of the strictest sublane alignment among input dtypes,
    # clamped to the array size.
    tile_rows = min(rows_per_tile, rows)
    tile_rows = max(align, (tile_rows // align) * align)
    n_tiles = pl.cdiv(rows, tile_rows)
    needs_row_mask = (rows % tile_rows) != 0

    kernel = functools.partial(
        _pst_loss_kernel,
        rows=rows,
        tile_rows=tile_rows,
        neg_inv_n=-1.0 / float(n),
        needs_row_mask=needs_row_mask,
    )

    bytes_per_elem = jnp.dtype(o2.dtype).itemsize + jnp.dtype(t2.dtype).itemsize

    loss = pl.pallas_call(
        kernel,
        out_shape=jax.ShapeDtypeStruct((1, 1), jnp.float32),
        grid_spec=pltpu.PrefetchScalarGridSpec(
            num_scalar_prefetch=0,
            grid=(n_tiles,),
            in_specs=[
                pl.BlockSpec((tile_rows, LANES), lambda i: (i, 0)),
                pl.BlockSpec((tile_rows, LANES), lambda i: (i, 0)),
            ],
            out_specs=pl.BlockSpec(memory_space=pltpu.SMEM),
            scratch_shapes=[pltpu.VMEM((SUBLANES, LANES), jnp.float32)],
        ),
        compiler_params=pltpu.CompilerParams(
            dimension_semantics=("arbitrary",),
        ),
        cost_estimate=pl.CostEstimate(
            flops=2 * prefix,
            transcendentals=prefix,
            bytes_accessed=prefix * bytes_per_elem + 4,
        ),
    )(o2, t2)
    result = loss[0, 0]

    if prefix < total:
        o_tail = flat_o[prefix:].astype(jnp.float32)
        t_tail = flat_t[prefix:]
        result = result + jnp.sum(
            jnp.where(t_tail > 0, -jnp.log(o_tail), 0.0)
        ) * jnp.float32(1.0 / n)
    return result


def pst_loss_ref(out, target):
    n = out.shape[0]
    o = out.astype(jnp.float32)
    t = target.astype(jnp.float32)
    masked = jnp.where(t > 0, -jnp.log(o), 0.0)
    return jnp.sum(masked) / n


if __name__ == "__main__":
    key = jax.random.PRNGKey(0)
    k_out, k_tgt, k_out2, k_tgt2 = jax.random.split(key, 4)

    # out: positive values (e.g. probabilities), target: some entries > 0
    N, C, H, W = 2, 3, 16, 16  # numPst = 3 channels
    out = jax.random.uniform(
        k_out, (N, C, H, W), dtype=jnp.float32, minval=0.05, maxval=1.0
    )
    target = jax.random.bernoulli(k_tgt, p=0.3, shape=(N, C, H, W)).astype(
        jnp.float32
    )

    loss = pst_loss(out, target)
    jax.block_until_ready(loss)
    ref = pst_loss_ref(out, target)
    assert jnp.allclose(loss, ref, rtol=1e-5, atol=1e-5), (loss, ref)

    # Misaligned-total case: exercises the kernel-prefix + jnp-tail path.
    out_m = jax.random.uniform(
        k_out2, (2, 3, 16, 17), dtype=jnp.float32, minval=0.05, maxval=1.0
    )
    target_m = jax.random.bernoulli(k_tgt2, p=0.3, shape=(2, 3, 16, 17)).astype(
        jnp.float32
    )
    loss_m = pst_loss(out_m, target_m)
    jax.block_until_ready(loss_m)
    ref_m = pst_loss_ref(out_m, target_m)
    assert jnp.allclose(loss_m, ref_m, rtol=1e-5, atol=1e-5), (loss_m, ref_m)

    print("KERNEL_OK")
</pallas_src>

<mosaic_0001>
module attributes {stable_mosaic.version = 11 : i64} {
  func.func @_pst_loss_kernel(%arg0: i32, %arg1: memref<8x128xf32, #tpu.memory_space<vmem>>, %arg2: memref<8x128xf32, #tpu.memory_space<vmem>>, %arg3: memref<1x1xf32, #tpu.memory_space<smem>>, %arg4: memref<8x128xf32, #tpu.memory_space<vmem>>) attributes {dimension_semantics = [#tpu.dimension_semantics<arbitrary>], iteration_bounds = array<i64: 2>, scalar_prefetch = 0 : i64, scratch_operands = 1 : i64, tpu.core_type = #tpu.core_type<tc>, window_params = [{transform_indices = @transform_0, window_bounds = array<i64: 8, 128>}, {transform_indices = @transform_1, window_bounds = array<i64: 8, 128>}, {transform_indices = @transform_2, window_bounds = array<i64: 1, 1>}]} {
    %c0_i32 = arith.constant 0 : i32
    %0 = arith.cmpi eq, %arg0, %c0_i32 : i32
    %1 = arith.extui %0 : i1 to i32
    %c0_i32_0 = arith.constant 0 : i32
    %2 = arith.cmpi ne, %1, %c0_i32_0 : i32
    scf.if %2 {
      %cst_11 = arith.constant 0.000000e+00 : f32
      %24 = vector.broadcast %cst_11 : f32 to vector<8x128xf32>
      %c0_12 = arith.constant 0 : index
      %c0_13 = arith.constant 0 : index
      %25 = vector.load %arg4[%c0_12, %c0_13] : memref<8x128xf32, #tpu.memory_space<vmem>>, vector<8x128xf32>
      tpu.vector_store %arg4[%c0_12, %c0_13], %24 {strides = array<i32>} : memref<8x128xf32, #tpu.memory_space<vmem>>, vector<8x128xf32>,
    } else {
    }
    %c0 = arith.constant 0 : index
    %c0_1 = arith.constant 0 : index
    %3 = vector.load %arg1[%c0, %c0_1] : memref<8x128xf32, #tpu.memory_space<vmem>>, vector<8x128xf32>
    %c0_2 = arith.constant 0 : index
    %c0_3 = arith.constant 0 : index
    %4 = vector.load %arg2[%c0_2, %c0_3] : memref<8x128xf32, #tpu.memory_space<vmem>>, vector<8x128xf32>
    %cst = arith.constant 0.000000e+00 : f32
    %5 = vector.broadcast %cst : f32 to vector<8x128xf32>
    %6 = arith.cmpf ogt, %4, %5 : vector<8x128xf32>
    %7 = tpu.iota {dimensions = array<i32: 0>} : vector<8x128xi32>
    %c8_i32 = arith.constant 8 : i32
    %8 = arith.muli %arg0, %c8_i32 : i32
    %c12_i32 = arith.constant 12 : i32
    %9 = arith.subi %c12_i32, %8 : i32
    %10 = vector.broadcast %9 : i32 to vector<8x128xi32>
    %11 = arith.cmpi slt, %7, %10 : vector<8x128xi32>
    %12 = arith.andi %6, %11 : vector<8x128xi1>
    %cst_4 = arith.constant 1.000000e+00 : f32
    %13 = vector.broadcast %cst_4 : f32 to vector<8x128xf32>
    %14 = arith.select %12, %3, %13 : vector<8x128xi1>, vector<8x128xf32>
    %15 = math.log %14 : vector<8x128xf32>
    %c0_5 = arith.constant 0 : index
    %c0_6 = arith.constant 0 : index
    %16 = vector.load %arg4[%c0_5, %c0_6] : memref<8x128xf32, #tpu.memory_space<vmem>>, vector<8x128xf32>
    %17 = vector.shape_cast %15 : vector<8x128xf32> to vector<1x8x128xf32>
    %cst_7 = arith.constant dense<0.000000e+00> : vector<8x128xf32>
    %18 = vector.multi_reduction <add>, %17, %cst_7 [0] : vector<1x8x128xf32> to vector<8x128xf32>
    %19 = arith.addf %16, %18 : vector<8x128xf32>
    %c0_8 = arith.constant 0 : index
    %c0_9 = arith.constant 0 : index
    %20 = vector.load %arg4[%c0_8, %c0_9] : memref<8x128xf32, #tpu.memory_space<vmem>>, vector<8x128xf32>
    tpu.vector_store %arg4[%c0_8, %c0_9], %19 {strides = array<i32>} : memref<8x128xf32, #tpu.memory_space<vmem>>, vector<8x128xf32>,
    %c1_i32 = arith.constant 1 : i32
    %21 = arith.cmpi eq, %arg0, %c1_i32 : i32
    %22 = arith.extui %21 : i1 to i32
    %c0_i32_10 = arith.constant 0 : i32
    %23 = arith.cmpi ne, %22, %c0_i32_10 : i32
    scf.if %23 {
      %c0_11 = arith.constant 0 : index
      %c0_12 = arith.constant 0 : index
      %24 = vector.load %arg4[%c0_11, %c0_12] : memref<8x128xf32, #tpu.memory_space<vmem>>, vector<8x128xf32>
      %25 = vector.shape_cast %24 : vector<8x128xf32> to vector<1x8x128xf32>
      %cst_13 = arith.constant dense<0.000000e+00> : vector<1xf32>
      %26 = vector.multi_reduction <add>, %25, %cst_13 [1, 2] : vector<1x8x128xf32> to vector<1xf32>
      %27 = vector.shape_cast %26 : vector<1xf32> to vector<1x1x1xf32>
      %28 = vector.extract %27[0, 0, 0] : f32 from vector<1x1x1xf32>
      %cst_14 = arith.constant -5.000000e-01 : f32
      %29 = arith.mulf %28, %cst_14 : f32
      %c0_15 = arith.constant 0 : index
      %c0_16 = arith.constant 0 : index
      %30 = memref.load %arg3[%c0_15, %c0_16] : memref<1x1xf32, #tpu.memory_space<smem>>
      memref.store %29, %arg3[%c0_15, %c0_16] : memref<1x1xf32, #tpu.memory_space<smem>>
    } else {
    }
    return
  }
  func.func @transform_0(%arg0: i32) -> (i32, i32) {
    %c0_i32 = arith.constant 0 : i32
    %c0_i32_0 = arith.constant 0 : i32
    return %arg0, %c0_i32 : i32, i32
  }
  func.func @transform_1(%arg0: i32) -> (i32, i32) {
    %c0_i32 = arith.constant 0 : i32
    %c0_i32_0 = arith.constant 0 : i32
    return %arg0, %c0_i32 : i32, i32
  }
  func.func @transform_2(%arg0: i32) -> (i32, i32) {
    %c0_i32 = arith.constant 0 : i32
    %c0_i32_0 = arith.constant 0 : i32
    %c0_i32_1 = arith.constant 0 : i32
    return %c0_i32, %c0_i32_0 : i32, i32
  }
}

</mosaic_0001>

<llo_original>
// kernel: tpu_custom_call.1
$region0: #{tpu_custom_call.1}
  #allocation0 [shape = 'u32[]', space=smem, size = 0x4, offset = 0x4, fixed_abs, tag = 'smem constant byte address 0x4 - core index']
  #allocation1 [shape = 'u32[144,128]{1,0:T(1,128)}', space=vmem, size = 0x12000, scoped, tag = 'internal scratch']
  #allocation2 [shape = 'f32[8,128]{1,0:T(8,128)}', space=vmem, size = 0x1000, scoped, tag = 'scratch operand']
  %s0 = inlined_call_operand.hbm [shape: f32[12,128], index: 0, kind: input, shape index: {}]
  %s1 = inlined_call_operand.hbm [shape: f32[12,128], index: 1, kind: input, shape index: {}]
  %s2 = inlined_call_operand.hbm [shape: f32[1,1], index: 2, kind: output, shape index: {}]
  %s3 = sld [smem:[#allocation0]]
  $region57: #{tpu_custom_call.1} parent=0
    _
  %s5 = ssub.s32 1, %s3
  %s6 = scalar_select 0, %s5, %s3
  $region1: #{tpu_custom_call.1} parent=0
    #allocation3 [shape = 'u8[8192]{0}', space=vmem, size = 0x2000, scoped, tag = 'input window, operand 0']
    #allocation4 [shape = 's32[2]{0}', space=sflag, size = 0x8, scoped, tag = 'scoped memory for tpu_custom_call.1']
    #allocation5 [shape = 's32[2]{0}', space=sflag, size = 0x8, scoped, tag = 'scoped memory for tpu_custom_call.1']
    #allocation6 [shape = 'u8[8192]{0}', space=vmem, size = 0x2000, scoped, tag = 'input window, operand 1']
    #allocation7 [shape = 's32[2]{0}', space=sflag, size = 0x8, scoped, tag = 'scoped memory for tpu_custom_call.1']
    #allocation8 [shape = 'u8[512]{0}', space=smem, size = 0x200, scoped, tag = 'output window, operand 0, single buffered']
    %7 = vsyncpa [#allocation4], 0
    %s8 = scalar_lea.sflag [#allocation4], 1
    %9 = vsyncpa %s8, 0
    %10 = vsyncpa [#allocation7], 0
    %s11 = scalar_lea.sflag [#allocation7], 1
    %12 = vsyncpa %s11, 0
    %13 = vsyncpa [#allocation5], 0
    loop: start=0, step=1, limit=4
    $region2: #{tpu_custom_call.1} parent=1 // loop_pre_header
      _
    $region3: #{tpu_custom_call.1} parent=1 // loop_header
      %s15 = sphi 0, %s19
      %p16 = scmp.ge.s32.totalorder %s15, 4
      %s25 = sphi 0, %s27
      %s28 = sphi 0, %s25
      %s29 = sphi 0, %s28
      %s45 = sphi 0, %s29
      %s51 = sphi 0, %s53
      %s54 = sphi 0, %s51
      %s55 = sphi 0, %s54
      %s71 = sphi 0, %s55
      %s75 = sphi 0, %s75
      %s77 = sphi 0, %s75
      %s78 = sphi 0, %s77
      %s92 = sphi 0, %s78
    $region4: #{tpu_custom_call.1} parent=1 // loop_header_branch
      %18 = sbr.rel (%p16) target = $region8
    $region5: #{tpu_custom_call.1} parent=1 // loop_body
      %s20 = ssub.s32 %s15, 1
      %s21 = ssub.s32 %s15, 2
      %s22 = sadd.s32 %s15, 1
      %s23 = ssub.s32 %s15, %s22
      %p24 = scmp.eq.s32.totalorder %s23, 0
      %s26 = sadd.s32 %s25, 1
      %s27 = scalar_select %p24, %s25, %s26
      %p30 = pneg %p24
      %p31 = scmp.eq.s32.totalorder %s15, 1
      %p32 = por %p30, %p31
      %p33 = scmp.ne.s32.totalorder %s25, %s28
      %p34 = scmp.eq.s32.totalorder %s15, 0
      %p35 = por %p33, %p34
      %p36 = scmp.ne.s32.totalorder %s25, %s28
      %p37 = scmp.eq.s32.totalorder %s20, 1
      %p38 = por %p36, %p37
      %p39 = scmp.ne.s32.totalorder %s28, %s29
      %p40 = scmp.eq.s32.totalorder %s20, 0
      %p41 = por %p39, %p40
      %p42 = scmp.ne.s32.totalorder %s28, %s29
      %p43 = scmp.eq.s32.totalorder %s21, 1
      %p44 = por %p42, %p43
      %p46 = scmp.ne.s32.totalorder %s29, %s45
      %p47 = scmp.eq.s32.totalorder %s21, 0
      %p48 = por %p46, %p47
      %s49 = ssub.s32 %s15, %s22
      %p50 = scmp.eq.s32.totalorder %s49, 0
      %s52 = sadd.s32 %s51, 1
      %s53 = scalar_select %p50, %s51, %s52
      %p56 = pneg %p50
      %p57 = scmp.eq.s32.totalorder %s15, 1
      %p58 = por %p56, %p57
      %p59 = scmp.ne.s32.totalorder %s51, %s54
      %p60 = scmp.eq.s32.totalorder %s15, 0
      %p61 = por %p59, %p60
      %p62 = scmp.ne.s32.totalorder %s51, %s54
      %p63 = scmp.eq.s32.totalorder %s20, 1
      %p64 = por %p62, %p63
      %p65 = scmp.ne.s32.totalorder %s54, %s55
      %p66 = scmp.eq.s32.totalorder %s20, 0
      %p67 = por %p65, %p66
      %p68 = scmp.ne.s32.totalorder %s54, %s55
      %p69 = scmp.eq.s32.totalorder %s21, 1
      %p70 = por %p68, %p69
      %p72 = scmp.ne.s32.totalorder %s55, %s71
      %p73 = scmp.eq.s32.totalorder %s21, 0
      %p74 = por %p72, %p73
      %s76 = sadd.s32 %s75, 1
      %p79 = scmp.eq.s32.totalorder %s15, 1
      %p80 = scmp.ne.s32.totalorder %s75, %s77
      %p81 = scmp.eq.s32.totalorder %s15, 0
      %p82 = por %p80, %p81
      %p83 = scmp.ne.s32.totalorder %s75, %s77
      %p84 = scmp.eq.s32.totalorder %s20, 1
      %p85 = por %p83, %p84
      %p86 = scmp.ne.s32.totalorder %s77, %s78
      %p87 = scmp.eq.s32.totalorder %s20, 0
      %p88 = por %p86, %p87
      %p89 = scmp.ne.s32.totalorder %s77, %s78
      %p90 = scmp.eq.s32.totalorder %s21, 1
      %p91 = por %p89, %p90
      %p93 = scmp.ne.s32.totalorder %s78, %s92
      %p94 = scmp.eq.s32.totalorder %s21, 0
      %p95 = por %p93, %p94
      %p96 = scmp.le.s32.totalorder 1, %s15
      %p97 = scmp.lt.s32.totalorder %s15, 3
      %p98 = pnand %p96, %p97
      %p99 = pneg %p98
      // Predicated region
      $region9: #{tpu_custom_call.1} parent=5 // pred_check
        _
      $region10: #{tpu_custom_call.1} parent=5 // pred_check_branch
        %101 = sbr.rel (%p98) target = $region12
      $region11: #{tpu_custom_call.1} parent=5 // pred_region
        %s102 = ssub.s32 %s15, 1
      $region12: #{tpu_custom_call.1} parent=5 // pred_fallthru
        _
      %p103 = scmp.lt.s32.totalorder %s15, 2
      // Predicated region
      $region13: #{tpu_custom_call.1} parent=5 // pred_check
        %p104 = pneg %p103
      $region14: #{tpu_custom_call.1} parent=5 // pred_check_branch
        %106 = sbr.rel (%p104) target = $region16
      $region15: #{tpu_custom_call.1} parent=5 // pred_region
        // Predicated region
        $region17: #{tpu_custom_call.1} parent=15 // pred_check
          %p107 = pneg %p35
        $region18: #{tpu_custom_call.1} parent=15 // pred_check_branch
          %109 = sbr.rel (%p107) target = $region20
        $region19: #{tpu_custom_call.1} parent=15 // pred_region
          %s110 = sand.u32 %s25, 1
          %s111 = scalar_lea.sflag [#allocation4], %s110
          %s112 = sand.u32 %s25, 1
          %s113 = smul.addr %s112, 8
          %s114 = scalar_lea.vmem [#allocation3], %s113
          %s116 = ssub.s32 128, 128
          %117 = vsyncadd %s111, %s116
          %s118 = smul.addr %s15, 128
          %s119 = scalar_lea.hbm %s0, %s118
          %s121 = sshll.u32 %s114, 4
          %s122 = int_to_ptr.vmem [resolvable:$true] %s121
          %124 = dma.hbm_to_vmem [thread:$0]  %s119, 128, %s122, %s111
        $region20: #{tpu_custom_call.1} parent=15 // pred_fallthru
          _
        // Predicated region
        $region21: #{tpu_custom_call.1} parent=15 // pred_check
          %p125 = pneg %p61
        $region22: #{tpu_custom_call.1} parent=15 // pred_check_branch
          %127 = sbr.rel (%p125) target = $region24
        $region23: #{tpu_custom_call.1} parent=15 // pred_region
          %s128 = sand.u32 %s51, 1
          %s129 = scalar_lea.sflag [#allocation7], %s128
          %s130 = sand.u32 %s51, 1
          %s131 = smul.addr %s130, 8
          %s132 = scalar_lea.vmem [#allocation6], %s131
          %s134 = ssub.s32 128, 128
          %135 = vsyncadd %s129, %s134
          %s136 = smul.addr %s15, 128
          %s137 = scalar_lea.hbm %s1, %s136
          %s139 = sshll.u32 %s132, 4
          %s140 = int_to_ptr.vmem [resolvable:$true] %s139
          %142 = dma.hbm_to_vmem [thread:$0]  %s137, 128, %s140, %s129
        $region24: #{tpu_custom_call.1} parent=15 // pred_fallthru
          _
      $region16: #{tpu_custom_call.1} parent=5 // pred_fallthru
        _
      %p143 = scmp.le.s32.totalorder 1, %s15
      %p144 = scmp.lt.s32.totalorder %s15, 3
      %p145 = pnand %p143, %p144
      %p146 = pneg %p145
      // Predicated region
      $region25: #{tpu_custom_call.1} parent=5 // pred_check
        _
      $region26: #{tpu_custom_call.1} parent=5 // pred_check_branch
        %148 = sbr.rel (%p145) target = $region28
      $region27: #{tpu_custom_call.1} parent=5 // pred_region
        %s149 = ssub.s32 %s15, 1
        %s150 = sand.u32 %s28, 1
        %s151 = scalar_lea.sflag [#allocation4], %s150
        %s152 = sand.u32 %s28, 1
        %s153 = smul.addr %s152, 8
        %s154 = scalar_lea.vmem [#allocation3], %s153
        // Predicated region
        $region29: #{tpu_custom_call.1} parent=27 // pred_check
          %p155 = pneg %p41
        $region30: #{tpu_custom_call.1} parent=27 // pred_check_branch
          %157 = sbr.rel (%p155) target = $region32
        $region31: #{tpu_custom_call.1} parent=27 // pred_region
          %158 = dma.done %s151, 128
        $region32: #{tpu_custom_call.1} parent=27 // pred_fallthru
          _
        %s159 = sand.u32 %s54, 1
        %s160 = scalar_lea.sflag [#allocation7], %s159
        %s161 = sand.u32 %s54, 1
        %s162 = smul.addr %s161, 8
        %s163 = scalar_lea.vmem [#allocation6], %s162
        // Predicated region
        $region33: #{tpu_custom_call.1} parent=27 // pred_check
          %p164 = pneg %p67
        $region34: #{tpu_custom_call.1} parent=27 // pred_check_branch
          %166 = sbr.rel (%p164) target = $region36
        $region35: #{tpu_custom_call.1} parent=27 // pred_region
          %167 = dma.done %s160, 128
        $region36: #{tpu_custom_call.1} parent=27 // pred_fallthru
          _
        %s168 = sand.u32 %s28, 1
        %s169 = scalar_lea.sflag [#allocation4], %s168
        %s170 = sand.u32 %s28, 1
        %s171 = smul.addr %s170, 8
        %s172 = scalar_lea.vmem [#allocation3], %s171
        %p173 = pneg %p41
        %p174 = pneg %p38
        %s175 = sand.u32 %s54, 1
        %s176 = scalar_lea.sflag [#allocation7], %s175
        %s177 = sand.u32 %s54, 1
        %s178 = smul.addr %s177, 8
        %s179 = scalar_lea.vmem [#allocation6], %s178
        %p180 = pneg %p67
        %p181 = pneg %p64
        %p182 = pneg %p88
        %p183 = pneg %p85
        %p184 = scmp.eq.s32.totalorder %s20, 0
        // Predicated region
        $region37: #{tpu_custom_call.1} parent=27 // pred_check
          %p185 = pneg %p184
        $region38: #{tpu_custom_call.1} parent=27 // pred_check_branch
          %187 = sbr.rel (%p185) target = $region40
        $region39: #{tpu_custom_call.1} parent=27 // pred_region
          %188 = vst [vmem:[#allocation2] sm:$0xff] 0.0
        $region40: #{tpu_custom_call.1} parent=27 // pred_fallthru
          _
        %v189 = vld [vmem:[%s154] sm:$0xff]
        %v190 = vld [vmem:[%s163] sm:$0xff]
        %vm191 = vcmp.gt.f32.partialorder %v190, 0.0
        %v192 = vlaneseq
        %v193 = vshrl.u32 %v192, 7
        %s194 = smul.u32 %s20, 8
        %s195 = ssub.s32 12, %s194
        %v196 = vstv %s195
        %vm197 = vcmp.lt.s32.totalorder %v193, %v196
        %vm198 = vmand %vm191, %vm197
        %v199 = vsel %vm198, %v189, 1.0
        %v200 = vlog2.pop %v199
        %v201 = vmul.f32 %v200, 0.6931472
        %v202 = vld [vmem:[#allocation2] sm:$0xff]
        %v203 = vadd.f32 %v201, 0.0
        %v204 = vadd.f32 %v202, %v203
        %205 = vst [vmem:[#allocation2] sm:$0xff] %v204
        %p206 = scmp.eq.s32.totalorder %s20, 1
        // Predicated region
        $region41: #{tpu_custom_call.1} parent=27 // pred_check
          %p207 = pneg %p206
        $region42: #{tpu_custom_call.1} parent=27 // pred_check_branch
          %209 = sbr.rel (%p207) target = $region44
        $region43: #{tpu_custom_call.1} parent=27 // pred_region
          %v210 = vld [vmem:[#allocation2] sm:$0xff]
          %211 = vadd.xlane.f32.xlu0 %v210
          %v212 = vpop.xlane.xlu0 %211
          %v213 = vrot.slane %v212, 4
          %v214 = vadd.f32 %v212, %v213
          %v215 = vrot.slane %v214, 2
          %v216 = vadd.f32 %v214, %v215
          %v217 = vrot.slane %v216, 1
          %v218 = vadd.f32 %v216, %v217
          %s219 = vtos %v218
          %s220 = smul.f32 %s219, -0.5
          %s221 = scalar_lea.smem [#allocation8], 0
          %222 = sst [smem:[%s221]] %s220
        $region44: #{tpu_custom_call.1} parent=27 // pred_fallthru
          _
        // Predicated region
        $region45: #{tpu_custom_call.1} parent=27 // pred_check
          %p223 = pneg %p85
        $region46: #{tpu_custom_call.1} parent=27 // pred_check_branch
          %225 = sbr.rel (%p223) target = $region48
        $region47: #{tpu_custom_call.1} parent=27 // pred_region
          %s227 = ssub.s32 16, 16
          %228 = vsyncadd [#allocation5], %s227
          %231 = dma.smem_to_hbm [#allocation8], 16, %s2, [#allocation5]
        $region48: #{tpu_custom_call.1} parent=27 // pred_fallthru
          _
        // Predicated region
        $region49: #{tpu_custom_call.1} parent=27 // pred_check
          %p232 = pneg %p85
        $region50: #{tpu_custom_call.1} parent=27 // pred_check_branch
          %234 = sbr.rel (%p232) target = $region52
        $region51: #{tpu_custom_call.1} parent=27 // pred_region
          %235 = dma.done [#allocation5], 16
        $region52: #{tpu_custom_call.1} parent=27 // pred_fallthru
          _
        %236 = sfence
      $region28: #{tpu_custom_call.1} parent=5 // pred_fallthru
        _
      %p237 = scmp.le.s32.totalorder 2, %s15
      // Predicated region
      $region53: #{tpu_custom_call.1} parent=5 // pred_check
        %p238 = pneg %p237
      $region54: #{tpu_custom_call.1} parent=5 // pred_check_branch
        %240 = sbr.rel (%p238) target = $region56
      $region55: #{tpu_custom_call.1} parent=5 // pred_region
        %s241 = ssub.s32 %s15, 2
      $region56: #{tpu_custom_call.1} parent=5 // pred_fallthru
        _
    $region6: #{tpu_custom_call.1} parent=1 // loop_footer
      %s19 = sadd.s32 1, %s15
    $region7: #{tpu_custom_call.1} parent=1 // loop_footer_branch
      %14 = sbr.rel target = $region3
    $region8: #{tpu_custom_call.1} parent=1 // loop_exit
      _
    %242 = vsyncpa [#allocation4], 1
    %s243 = scalar_lea.sflag [#allocation4], 1
    %244 = vsyncpa %s243, 1
    %245 = vsyncpa [#allocation7], 1
    %s246 = scalar_lea.sflag [#allocation7], 1
    %247 = vsyncpa %s246, 1
    %248 = vsyncpa [#allocation5], 1
    %s249 = scalar_lea.sflag [#allocation5], 1
    %250 = vsyncpa %s249, 1

</llo_original>
